<compile_context>
chip_gen: v5e
topology: v5e:2x2
jax: 0.10.0
libtpu: 0.0.40
codegen_flags: <defaults>
</compile_context>

<pallas_src>
from functools import partial

import jax
import jax.numpy as jnp
import numpy as np
from jax.experimental import pallas as pl
from jax.experimental.pallas import tpu as pltpu


# ----------------------------------------------------------------------------
# Fused kernel: qkv projection -> per-head attention -> output projection.
# One grid step per batch *block*; weights resident in VMEM (constant index_map).
# ----------------------------------------------------------------------------
def fused_attention_kernel(x_ref, wqkv_ref, wpb_ref, o_ref, *,
                           num_heads, head_dim, all_head_dim):
    Bt, N, C = x_ref.shape
    M = Bt * N
    A = all_head_dim
    H = num_heads
    hd = head_dim
    mm_dtype = x_ref.dtype  # MXU operand dtype (bf16 stays bf16, f32 stays f32)

    # --- fat qkv projection: all Bt*N rows, all heads and q/k/v in one matmul
    x2 = x_ref[...].reshape(M, C)
    qkv = jnp.dot(x2, wqkv_ref[...],
                  preferred_element_type=jnp.float32)              # (M, 3A) f32
    qkv = qkv.reshape(Bt, N, 3 * A)

    # --- per-head attention, batched over the Bt batch elements -------------
    # TODO(synk): attn_drop / proj_drop are nn.Dropout(0.0) -> identity; no RNG path emitted.
    outs = []
    for h in range(H):                                             # H static, unrolled
        lo = h * hd
        q = qkv[:, :, lo:lo + hd].astype(mm_dtype)                 # (Bt, N, hd); scale folded into Wq
        k = qkv[:, :, A + lo:A + lo + hd].astype(mm_dtype)
        v = qkv[:, :, 2 * A + lo:2 * A + lo + hd].astype(mm_dtype)

        s = jnp.einsum('bqd,bkd->bqk', q, k,
                       preferred_element_type=jnp.float32)         # (Bt, N, N)
        s = s - jnp.max(s, axis=-1, keepdims=True)
        p = jnp.exp(s)
        p = p * pl.reciprocal(jnp.sum(p, axis=-1, keepdims=True))  # exact EUP reciprocal

        outs.append(jnp.einsum('bqk,bkd->bqd', p.astype(mm_dtype), v,
                               preferred_element_type=jnp.float32))  # (Bt, N, hd)

    # --- single output projection (+ bias packed as last weight row) --------
    o_cat = jnp.concatenate(outs, axis=-1).reshape(M, A).astype(mm_dtype)
    out = jnp.dot(o_cat, wpb_ref[:A, :],
                  preferred_element_type=jnp.float32)              # (M, C)
    out = out + wpb_ref[A:A + 1, :].astype(jnp.float32)            # + b_proj
    o_ref[...] = out.reshape(Bt, N, C).astype(o_ref.dtype)


# ----------------------------------------------------------------------------
# Batch-block choice: fold batch into the matmul M dimension but keep >= 2
# parallel grid blocks when B >= 2 so v7x's two TensorCores both get work.
# ----------------------------------------------------------------------------
def _choose_batch_block(B, N):
    bt = max(1, min(B, 256 // max(N, 1)))   # target Bt*N >= 256 rows when possible
    if B >= 2:
        bt = min(bt, max(1, B // 2))        # keep >= 2 grid blocks
    while B % bt:                            # Bt must divide B for the simple BlockSpec
        bt -= 1
    return bt


# ----------------------------------------------------------------------------
# Module forward (single fused pallas_call)
# ----------------------------------------------------------------------------
def attention_forward(x, w_qkv, w_proj, b_proj, *, num_heads):
    """x: (B, N, C); w_qkv: (3*A, C); w_proj: (C, A); b_proj: (C,)."""
    B, N, C = x.shape
    all_head_dim = w_qkv.shape[0] // 3
    head_dim = all_head_dim // num_heads
    scale = head_dim ** (-0.5)
    A = all_head_dim

    # One-time constant-weight re-layouts (done once, outside the kernel):
    #  * wqkv_t : (C, 3A) so x @ wqkv_t is the full qkv projection; the softmax
    #    scale is folded into the q columns.
    #  * wpb    : (A+1, C) = [Wproj^T ; b_proj] so the bias rides in the same
    #    resident VMEM buffer (one fewer input DMA / buffer pair).
    wqkv_t = jnp.asarray(w_qkv).T
    wqkv_t = jnp.concatenate([wqkv_t[:, :A] * scale, wqkv_t[:, A:]], axis=1)
    wpb = jnp.concatenate(
        [jnp.asarray(w_proj).T,
         jnp.asarray(b_proj).reshape(1, C).astype(w_proj.dtype)], axis=0)  # (A+1, C)

    Bt = _choose_batch_block(B, N)
    grid = (B // Bt,)

    kernel = partial(fused_attention_kernel, num_heads=num_heads,
                     head_dim=head_dim, all_head_dim=A)

    itemsize = jnp.dtype(x.dtype).itemsize
    w_itemsize = jnp.dtype(w_qkv.dtype).itemsize
    flops = (2 * B * N * C * 3 * A                     # qkv projection
             + 4 * B * num_heads * N * N * head_dim    # q@k^T and p@v
             + 2 * B * N * A * C)                      # output projection
    cost = pl.CostEstimate(
        flops=flops,
        transcendentals=B * num_heads * N * N,
        bytes_accessed=(2 * B * N * C * itemsize
                        + (C * 3 * A + (A + 1) * C) * w_itemsize))

    # TODO(synk): at realistic C (e.g. 768) the resident weights should be
    # single-buffered (pipeline_mode=pl.Buffered(1)) or DMA'd once into VMEM
    # scratch, and vmem_limit_bytes set explicitly (v5e 16 MiB / v7x 32 MiB
    # scoped defaults); at these tiny shapes the defaults are ample.
    # TODO(synk): for large N the f32 (N, N) scores need a flash-style
    # kv-tiled online softmax sized to v7x's 64 MiB physical VMEM.
    return pl.pallas_call(
        kernel,
        out_shape=jax.ShapeDtypeStruct((B, N, C), x.dtype),
        grid=grid,
        in_specs=[
            pl.BlockSpec((Bt, N, C), lambda b: (b, 0, 0)),
            pl.BlockSpec((C, 3 * A), lambda b: (0, 0)),
            pl.BlockSpec((A + 1, C), lambda b: (0, 0)),
        ],
        out_specs=pl.BlockSpec((Bt, N, C), lambda b: (b, 0, 0)),
        compiler_params=pltpu.CompilerParams(
            dimension_semantics=("parallel",)),
        cost_estimate=cost,
    )(x, wqkv_t, wpb)


# ----------------------------------------------------------------------------
# Pure-JAX reference for validation
# ----------------------------------------------------------------------------
def attention_ref(x, w_qkv, w_proj, b_proj, *, num_heads):
    B, N, C = x.shape
    all_head_dim = w_qkv.shape[0] // 3
    head_dim = all_head_dim // num_heads
    scale = head_dim ** (-0.5)

    qkv = x @ w_qkv.T
    qkv = qkv.reshape(B, N, 3, num_heads, head_dim).transpose(2, 0, 3, 1, 4)
    q, k, v = qkv[0], qkv[1], qkv[2]
    q = q * scale
    attn = q @ jnp.swapaxes(k, -2, -1)
    attn = jax.nn.softmax(attn, axis=-1)
    out = (attn @ v).transpose(0, 2, 1, 3).reshape(B, N, -1)
    return out @ w_proj.T + b_proj


if __name__ == "__main__":
    # Small shapes consistent with the module: dim=32, num_heads=8 -> head_dim=4
    B, N, C = 2, 8, 32
    num_heads = 8
    all_head_dim = C  # head_dim * num_heads

    key = jax.random.PRNGKey(0)
    kx, kq, kp, kb = jax.random.split(key, 4)

    x = jax.random.normal(kx, (B, N, C), dtype=jnp.float32)
    # PyTorch nn.Linear weight convention: (out_features, in_features)
    w_qkv = jax.random.normal(kq, (3 * all_head_dim, C), dtype=jnp.float32) * 0.05
    w_proj = jax.random.normal(kp, (C, all_head_dim), dtype=jnp.float32) * 0.05
    b_proj = jax.random.normal(kb, (C,), dtype=jnp.float32) * 0.05

    out = attention_forward(x, w_qkv, w_proj, b_proj, num_heads=num_heads)
    out = jax.block_until_ready(out)

    ref = attention_ref(x, w_qkv, w_proj, b_proj, num_heads=num_heads)
    np.testing.assert_allclose(np.asarray(out), np.asarray(ref), rtol=1e-3, atol=1e-3)

    print("KERNEL_OK")
</pallas_src>

<mosaic_0001>
module attributes {stable_mosaic.version = 11 : i64} {
  func.func @fused_attention_kernel(%arg0: i32, %arg1: memref<1x8x32xf32, #tpu.memory_space<vmem>>, %arg2: memref<32x96xf32, #tpu.memory_space<vmem>>, %arg3: memref<33x32xf32, #tpu.memory_space<vmem>>, %arg4: memref<1x8x32xf32, #tpu.memory_space<vmem>>) attributes {dimension_semantics = [#tpu.dimension_semantics<parallel>], iteration_bounds = array<i64: 2>, scalar_prefetch = 0 : i64, scratch_operands = 0 : i64, tpu.core_type = #tpu.core_type<tc>, window_params = [{transform_indices = @transform_0, window_bounds = array<i64: 1, 8, 32>}, {pipeline_mode = #tpu.pipeline_mode<synchronous>, transform_indices = @transform_1, window_bounds = array<i64: 32, 96>}, {pipeline_mode = #tpu.pipeline_mode<synchronous>, transform_indices = @transform_2, window_bounds = array<i64: 33, 32>}, {transform_indices = @transform_3, window_bounds = array<i64: 1, 8, 32>}]} {
    %c0 = arith.constant 0 : index
    %c0_0 = arith.constant 0 : index
    %c0_1 = arith.constant 0 : index
    %0 = vector.load %arg1[%c0, %c0_0, %c0_1] : memref<1x8x32xf32, #tpu.memory_space<vmem>>, vector<1x8x32xf32>
    %1 = vector.shape_cast %0 : vector<1x8x32xf32> to vector<8x32xf32>
    %c0_2 = arith.constant 0 : index
    %c0_3 = arith.constant 0 : index
    %2 = vector.load %arg2[%c0_2, %c0_3] : memref<32x96xf32, #tpu.memory_space<vmem>>, vector<32x96xf32>
    %cst = arith.constant dense<0.000000e+00> : vector<8x96xf32>
    %3 = tpu.matmul %1, %2, %cst {dimension_numbers = #tpu.dot_dimension_numbers<[1], [0], [0], [1], [0, 0, 1, 1], [], []>} : vector<8x32xf32>, vector<32x96xf32>, vector<8x96xf32> -> vector<8x96xf32>
    %4 = vector.shape_cast %3 : vector<8x96xf32> to vector<1x8x96xf32>
    %5 = vector.extract_strided_slice %4 {offsets = [0, 0, 0], sizes = [1, 8, 4], strides = [1, 1, 1]} : vector<1x8x96xf32> to vector<1x8x4xf32>
    %6 = vector.extract_strided_slice %4 {offsets = [0, 0, 32], sizes = [1, 8, 4], strides = [1, 1, 1]} : vector<1x8x96xf32> to vector<1x8x4xf32>
    %7 = vector.extract_strided_slice %4 {offsets = [0, 0, 64], sizes = [1, 8, 4], strides = [1, 1, 1]} : vector<1x8x96xf32> to vector<1x8x4xf32>
    "tpu.trace_start"() <{level = 10 : i32, message = "bqd,bkd->bqk"}> : () -> ()
    %cst_4 = arith.constant dense<0.000000e+00> : vector<1x8x8xf32>
    %8 = tpu.matmul %5, %6, %cst_4 {dimension_numbers = #tpu.dot_dimension_numbers<[2], [2], [1], [1], [0, 0, 0, 1, 1, 1], [0], [0]>} : vector<1x8x4xf32>, vector<1x8x4xf32>, vector<1x8x8xf32> -> vector<1x8x8xf32>
    "tpu.trace_stop"() : () -> ()
    %cst_5 = arith.constant dense<0xFF800000> : vector<1x8xf32>
    %9 = vector.multi_reduction <maximumf>, %8, %cst_5 [2] : vector<1x8x8xf32> to vector<1x8xf32>
    %10 = vector.shape_cast %9 : vector<1x8xf32> to vector<1x8x1xf32>
    %11 = vector.broadcast %10 : vector<1x8x1xf32> to vector<1x8x8xf32>
    %12 = arith.subf %8, %11 : vector<1x8x8xf32>
    %13 = math.exp %12 : vector<1x8x8xf32>
    %cst_6 = arith.constant dense<0.000000e+00> : vector<1x8xf32>
    %14 = vector.multi_reduction <add>, %13, %cst_6 [2] : vector<1x8x8xf32> to vector<1x8xf32>
    %15 = vector.shape_cast %14 : vector<1x8xf32> to vector<1x8x1xf32>
    %16 = tpu.reciprocal %15 : vector<1x8x1xf32> -> vector<1x8x1xf32>
    %17 = vector.broadcast %16 : vector<1x8x1xf32> to vector<1x8x8xf32>
    %18 = arith.mulf %13, %17 : vector<1x8x8xf32>
    "tpu.trace_start"() <{level = 10 : i32, message = "bqk,bkd->bqd"}> : () -> ()
    %cst_7 = arith.constant dense<0.000000e+00> : vector<1x8x4xf32>
    %19 = tpu.matmul %18, %7, %cst_7 {dimension_numbers = #tpu.dot_dimension_numbers<[2], [1], [1], [2], [0, 0, 0, 1, 1, 2], [0], [0]>} : vector<1x8x8xf32>, vector<1x8x4xf32>, vector<1x8x4xf32> -> vector<1x8x4xf32>
    "tpu.trace_stop"() : () -> ()
    %20 = vector.extract_strided_slice %4 {offsets = [0, 0, 4], sizes = [1, 8, 4], strides = [1, 1, 1]} : vector<1x8x96xf32> to vector<1x8x4xf32>
    %21 = vector.extract_strided_slice %4 {offsets = [0, 0, 36], sizes = [1, 8, 4], strides = [1, 1, 1]} : vector<1x8x96xf32> to vector<1x8x4xf32>
    %22 = vector.extract_strided_slice %4 {offsets = [0, 0, 68], sizes = [1, 8, 4], strides = [1, 1, 1]} : vector<1x8x96xf32> to vector<1x8x4xf32>
    "tpu.trace_start"() <{level = 10 : i32, message = "bqd,bkd->bqk"}> : () -> ()
    %cst_8 = arith.constant dense<0.000000e+00> : vector<1x8x8xf32>
    %23 = tpu.matmul %20, %21, %cst_8 {dimension_numbers = #tpu.dot_dimension_numbers<[2], [2], [1], [1], [0, 0, 0, 1, 1, 1], [0], [0]>} : vector<1x8x4xf32>, vector<1x8x4xf32>, vector<1x8x8xf32> -> vector<1x8x8xf32>
    "tpu.trace_stop"() : () -> ()
    %cst_9 = arith.constant dense<0xFF800000> : vector<1x8xf32>
    %24 = vector.multi_reduction <maximumf>, %23, %cst_9 [2] : vector<1x8x8xf32> to vector<1x8xf32>
    %25 = vector.shape_cast %24 : vector<1x8xf32> to vector<1x8x1xf32>
    %26 = vector.broadcast %25 : vector<1x8x1xf32> to vector<1x8x8xf32>
    %27 = arith.subf %23, %26 : vector<1x8x8xf32>
    %28 = math.exp %27 : vector<1x8x8xf32>
    %cst_10 = arith.constant dense<0.000000e+00> : vector<1x8xf32>
    %29 = vector.multi_reduction <add>, %28, %cst_10 [2] : vector<1x8x8xf32> to vector<1x8xf32>
    %30 = vector.shape_cast %29 : vector<1x8xf32> to vector<1x8x1xf32>
    %31 = tpu.reciprocal %30 : vector<1x8x1xf32> -> vector<1x8x1xf32>
    %32 = vector.broadcast %31 : vector<1x8x1xf32> to vector<1x8x8xf32>
    %33 = arith.mulf %28, %32 : vector<1x8x8xf32>
    "tpu.trace_start"() <{level = 10 : i32, message = "bqk,bkd->bqd"}> : () -> ()
    %cst_11 = arith.constant dense<0.000000e+00> : vector<1x8x4xf32>
    %34 = tpu.matmul %33, %22, %cst_11 {dimension_numbers = #tpu.dot_dimension_numbers<[2], [1], [1], [2], [0, 0, 0, 1, 1, 2], [0], [0]>} : vector<1x8x8xf32>, vector<1x8x4xf32>, vector<1x8x4xf32> -> vector<1x8x4xf32>
    "tpu.trace_stop"() : () -> ()
    %35 = vector.extract_strided_slice %4 {offsets = [0, 0, 8], sizes = [1, 8, 4], strides = [1, 1, 1]} : vector<1x8x96xf32> to vector<1x8x4xf32>
    %36 = vector.extract_strided_slice %4 {offsets = [0, 0, 40], sizes = [1, 8, 4], strides = [1, 1, 1]} : vector<1x8x96xf32> to vector<1x8x4xf32>
    %37 = vector.extract_strided_slice %4 {offsets = [0, 0, 72], sizes = [1, 8, 4], strides = [1, 1, 1]} : vector<1x8x96xf32> to vector<1x8x4xf32>
    "tpu.trace_start"() <{level = 10 : i32, message = "bqd,bkd->bqk"}> : () -> ()
    %cst_12 = arith.constant dense<0.000000e+00> : vector<1x8x8xf32>
    %38 = tpu.matmul %35, %36, %cst_12 {dimension_numbers = #tpu.dot_dimension_numbers<[2], [2], [1], [1], [0, 0, 0, 1, 1, 1], [0], [0]>} : vector<1x8x4xf32>, vector<1x8x4xf32>, vector<1x8x8xf32> -> vector<1x8x8xf32>
    "tpu.trace_stop"() : () -> ()
    %cst_13 = arith.constant dense<0xFF800000> : vector<1x8xf32>
    %39 = vector.multi_reduction <maximumf>, %38, %cst_13 [2] : vector<1x8x8xf32> to vector<1x8xf32>
    %40 = vector.shape_cast %39 : vector<1x8xf32> to vector<1x8x1xf32>
    %41 = vector.broadcast %40 : vector<1x8x1xf32> to vector<1x8x8xf32>
    %42 = arith.subf %38, %41 : vector<1x8x8xf32>
    %43 = math.exp %42 : vector<1x8x8xf32>
    %cst_14 = arith.constant dense<0.000000e+00> : vector<1x8xf32>
    %44 = vector.multi_reduction <add>, %43, %cst_14 [2] : vector<1x8x8xf32> to vector<1x8xf32>
    %45 = vector.shape_cast %44 : vector<1x8xf32> to vector<1x8x1xf32>
    %46 = tpu.reciprocal %45 : vector<1x8x1xf32> -> vector<1x8x1xf32>
    %47 = vector.broadcast %46 : vector<1x8x1xf32> to vector<1x8x8xf32>
    %48 = arith.mulf %43, %47 : vector<1x8x8xf32>
    "tpu.trace_start"() <{level = 10 : i32, message = "bqk,bkd->bqd"}> : () -> ()
    %cst_15 = arith.constant dense<0.000000e+00> : vector<1x8x4xf32>
    %49 = tpu.matmul %48, %37, %cst_15 {dimension_numbers = #tpu.dot_dimension_numbers<[2], [1], [1], [2], [0, 0, 0, 1, 1, 2], [0], [0]>} : vector<1x8x8xf32>, vector<1x8x4xf32>, vector<1x8x4xf32> -> vector<1x8x4xf32>
    "tpu.trace_stop"() : () -> ()
    %50 = vector.extract_strided_slice %4 {offsets = [0, 0, 12], sizes = [1, 8, 4], strides = [1, 1, 1]} : vector<1x8x96xf32> to vector<1x8x4xf32>
    %51 = vector.extract_strided_slice %4 {offsets = [0, 0, 44], sizes = [1, 8, 4], strides = [1, 1, 1]} : vector<1x8x96xf32> to vector<1x8x4xf32>
    %52 = vector.extract_strided_slice %4 {offsets = [0, 0, 76], sizes = [1, 8, 4], strides = [1, 1, 1]} : vector<1x8x96xf32> to vector<1x8x4xf32>
    "tpu.trace_start"() <{level = 10 : i32, message = "bqd,bkd->bqk"}> : () -> ()
    %cst_16 = arith.constant dense<0.000000e+00> : vector<1x8x8xf32>
    %53 = tpu.matmul %50, %51, %cst_16 {dimension_numbers = #tpu.dot_dimension_numbers<[2], [2], [1], [1], [0, 0, 0, 1, 1, 1], [0], [0]>} : vector<1x8x4xf32>, vector<1x8x4xf32>, vector<1x8x8xf32> -> vector<1x8x8xf32>
    "tpu.trace_stop"() : () -> ()
    %cst_17 = arith.constant dense<0xFF800000> : vector<1x8xf32>
    %54 = vector.multi_reduction <maximumf>, %53, %cst_17 [2] : vector<1x8x8xf32> to vector<1x8xf32>
    %55 = vector.shape_cast %54 : vector<1x8xf32> to vector<1x8x1xf32>
    %56 = vector.broadcast %55 : vector<1x8x1xf32> to vector<1x8x8xf32>
    %57 = arith.subf %53, %56 : vector<1x8x8xf32>
    %58 = math.exp %57 : vector<1x8x8xf32>
    %cst_18 = arith.constant dense<0.000000e+00> : vector<1x8xf32>
    %59 = vector.multi_reduction <add>, %58, %cst_18 [2] : vector<1x8x8xf32> to vector<1x8xf32>
    %60 = vector.shape_cast %59 : vector<1x8xf32> to vector<1x8x1xf32>
    %61 = tpu.reciprocal %60 : vector<1x8x1xf32> -> vector<1x8x1xf32>
    %62 = vector.broadcast %61 : vector<1x8x1xf32> to vector<1x8x8xf32>
    %63 = arith.mulf %58, %62 : vector<1x8x8xf32>
    "tpu.trace_start"() <{level = 10 : i32, message = "bqk,bkd->bqd"}> : () -> ()
    %cst_19 = arith.constant dense<0.000000e+00> : vector<1x8x4xf32>
    %64 = tpu.matmul %63, %52, %cst_19 {dimension_numbers = #tpu.dot_dimension_numbers<[2], [1], [1], [2], [0, 0, 0, 1, 1, 2], [0], [0]>} : vector<1x8x8xf32>, vector<1x8x4xf32>, vector<1x8x4xf32> -> vector<1x8x4xf32>
    "tpu.trace_stop"() : () -> ()
    %65 = vector.extract_strided_slice %4 {offsets = [0, 0, 16], sizes = [1, 8, 4], strides = [1, 1, 1]} : vector<1x8x96xf32> to vector<1x8x4xf32>
    %66 = vector.extract_strided_slice %4 {offsets = [0, 0, 48], sizes = [1, 8, 4], strides = [1, 1, 1]} : vector<1x8x96xf32> to vector<1x8x4xf32>
    %67 = vector.extract_strided_slice %4 {offsets = [0, 0, 80], sizes = [1, 8, 4], strides = [1, 1, 1]} : vector<1x8x96xf32> to vector<1x8x4xf32>
    "tpu.trace_start"() <{level = 10 : i32, message = "bqd,bkd->bqk"}> : () -> ()
    %cst_20 = arith.constant dense<0.000000e+00> : vector<1x8x8xf32>
    %68 = tpu.matmul %65, %66, %cst_20 {dimension_numbers = #tpu.dot_dimension_numbers<[2], [2], [1], [1], [0, 0, 0, 1, 1, 1], [0], [0]>} : vector<1x8x4xf32>, vector<1x8x4xf32>, vector<1x8x8xf32> -> vector<1x8x8xf32>
    "tpu.trace_stop"() : () -> ()
    %cst_21 = arith.constant dense<0xFF800000> : vector<1x8xf32>
    %69 = vector.multi_reduction <maximumf>, %68, %cst_21 [2] : vector<1x8x8xf32> to vector<1x8xf32>
    %70 = vector.shape_cast %69 : vector<1x8xf32> to vector<1x8x1xf32>
    %71 = vector.broadcast %70 : vector<1x8x1xf32> to vector<1x8x8xf32>
    %72 = arith.subf %68, %71 : vector<1x8x8xf32>
    %73 = math.exp %72 : vector<1x8x8xf32>
    %cst_22 = arith.constant dense<0.000000e+00> : vector<1x8xf32>
    %74 = vector.multi_reduction <add>, %73, %cst_22 [2] : vector<1x8x8xf32> to vector<1x8xf32>
    %75 = vector.shape_cast %74 : vector<1x8xf32> to vector<1x8x1xf32>
    %76 = tpu.reciprocal %75 : vector<1x8x1xf32> -> vector<1x8x1xf32>
    %77 = vector.broadcast %76 : vector<1x8x1xf32> to vector<1x8x8xf32>
    %78 = arith.mulf %73, %77 : vector<1x8x8xf32>
    "tpu.trace_start"() <{level = 10 : i32, message = "bqk,bkd->bqd"}> : () -> ()
    %cst_23 = arith.constant dense<0.000000e+00> : vector<1x8x4xf32>
    %79 = tpu.matmul %78, %67, %cst_23 {dimension_numbers = #tpu.dot_dimension_numbers<[2], [1], [1], [2], [0, 0, 0, 1, 1, 2], [0], [0]>} : vector<1x8x8xf32>, vector<1x8x4xf32>, vector<1x8x4xf32> -> vector<1x8x4xf32>
    "tpu.trace_stop"() : () -> ()
    %80 = vector.extract_strided_slice %4 {offsets = [0, 0, 20], sizes = [1, 8, 4], strides = [1, 1, 1]} : vector<1x8x96xf32> to vector<1x8x4xf32>
    %81 = vector.extract_strided_slice %4 {offsets = [0, 0, 52], sizes = [1, 8, 4], strides = [1, 1, 1]} : vector<1x8x96xf32> to vector<1x8x4xf32>
    %82 = vector.extract_strided_slice %4 {offsets = [0, 0, 84], sizes = [1, 8, 4], strides = [1, 1, 1]} : vector<1x8x96xf32> to vector<1x8x4xf32>
    "tpu.trace_start"() <{level = 10 : i32, message = "bqd,bkd->bqk"}> : () -> ()
    %cst_24 = arith.constant dense<0.000000e+00> : vector<1x8x8xf32>
    %83 = tpu.matmul %80, %81, %cst_24 {dimension_numbers = #tpu.dot_dimension_numbers<[2], [2], [1], [1], [0, 0, 0, 1, 1, 1], [0], [0]>} : vector<1x8x4xf32>, vector<1x8x4xf32>, vector<1x8x8xf32> -> vector<1x8x8xf32>
    "tpu.trace_stop"() : () -> ()
    %cst_25 = arith.constant dense<0xFF800000> : vector<1x8xf32>
    %84 = vector.multi_reduction <maximumf>, %83, %cst_25 [2] : vector<1x8x8xf32> to vector<1x8xf32>
    %85 = vector.shape_cast %84 : vector<1x8xf32> to vector<1x8x1xf32>
    %86 = vector.broadcast %85 : vector<1x8x1xf32> to vector<1x8x8xf32>
    %87 = arith.subf %83, %86 : vector<1x8x8xf32>
    %88 = math.exp %87 : vector<1x8x8xf32>
    %cst_26 = arith.constant dense<0.000000e+00> : vector<1x8xf32>
    %89 = vector.multi_reduction <add>, %88, %cst_26 [2] : vector<1x8x8xf32> to vector<1x8xf32>
    %90 = vector.shape_cast %89 : vector<1x8xf32> to vector<1x8x1xf32>
    %91 = tpu.reciprocal %90 : vector<1x8x1xf32> -> vector<1x8x1xf32>
    %92 = vector.broadcast %91 : vector<1x8x1xf32> to vector<1x8x8xf32>
    %93 = arith.mulf %88, %92 : vector<1x8x8xf32>
    "tpu.trace_start"() <{level = 10 : i32, message = "bqk,bkd->bqd"}> : () -> ()
    %cst_27 = arith.constant dense<0.000000e+00> : vector<1x8x4xf32>
    %94 = tpu.matmul %93, %82, %cst_27 {dimension_numbers = #tpu.dot_dimension_numbers<[2], [1], [1], [2], [0, 0, 0, 1, 1, 2], [0], [0]>} : vector<1x8x8xf32>, vector<1x8x4xf32>, vector<1x8x4xf32> -> vector<1x8x4xf32>
    "tpu.trace_stop"() : () -> ()
    %95 = vector.extract_strided_slice %4 {offsets = [0, 0, 24], sizes = [1, 8, 4], strides = [1, 1, 1]} : vector<1x8x96xf32> to vector<1x8x4xf32>
    %96 = vector.extract_strided_slice %4 {offsets = [0, 0, 56], sizes = [1, 8, 4], strides = [1, 1, 1]} : vector<1x8x96xf32> to vector<1x8x4xf32>
    %97 = vector.extract_strided_slice %4 {offsets = [0, 0, 88], sizes = [1, 8, 4], strides = [1, 1, 1]} : vector<1x8x96xf32> to vector<1x8x4xf32>
    "tpu.trace_start"() <{level = 10 : i32, message = "bqd,bkd->bqk"}> : () -> ()
    %cst_28 = arith.constant dense<0.000000e+00> : vector<1x8x8xf32>
    %98 = tpu.matmul %95, %96, %cst_28 {dimension_numbers = #tpu.dot_dimension_numbers<[2], [2], [1], [1], [0, 0, 0, 1, 1, 1], [0], [0]>} : vector<1x8x4xf32>, vector<1x8x4xf32>, vector<1x8x8xf32> -> vector<1x8x8xf32>
    "tpu.trace_stop"() : () -> ()
    %cst_29 = arith.constant dense<0xFF800000> : vector<1x8xf32>
    %99 = vector.multi_reduction <maximumf>, %98, %cst_29 [2] : vector<1x8x8xf32> to vector<1x8xf32>
    %100 = vector.shape_cast %99 : vector<1x8xf32> to vector<1x8x1xf32>
    %101 = vector.broadcast %100 : vector<1x8x1xf32> to vector<1x8x8xf32>
    %102 = arith.subf %98, %101 : vector<1x8x8xf32>
    %103 = math.exp %102 : vector<1x8x8xf32>
    %cst_30 = arith.constant dense<0.000000e+00> : vector<1x8xf32>
    %104 = vector.multi_reduction <add>, %103, %cst_30 [2] : vector<1x8x8xf32> to vector<1x8xf32>
    %105 = vector.shape_cast %104 : vector<1x8xf32> to vector<1x8x1xf32>
    %106 = tpu.reciprocal %105 : vector<1x8x1xf32> -> vector<1x8x1xf32>
    %107 = vector.broadcast %106 : vector<1x8x1xf32> to vector<1x8x8xf32>
    %108 = arith.mulf %103, %107 : vector<1x8x8xf32>
    "tpu.trace_start"() <{level = 10 : i32, message = "bqk,bkd->bqd"}> : () -> ()
    %cst_31 = arith.constant dense<0.000000e+00> : vector<1x8x4xf32>
    %109 = tpu.matmul %108, %97, %cst_31 {dimension_numbers = #tpu.dot_dimension_numbers<[2], [1], [1], [2], [0, 0, 0, 1, 1, 2], [0], [0]>} : vector<1x8x8xf32>, vector<1x8x4xf32>, vector<1x8x4xf32> -> vector<1x8x4xf32>
    "tpu.trace_stop"() : () -> ()
    %110 = vector.extract_strided_slice %4 {offsets = [0, 0, 28], sizes = [1, 8, 4], strides = [1, 1, 1]} : vector<1x8x96xf32> to vector<1x8x4xf32>
    %111 = vector.extract_strided_slice %4 {offsets = [0, 0, 60], sizes = [1, 8, 4], strides = [1, 1, 1]} : vector<1x8x96xf32> to vector<1x8x4xf32>
    %112 = vector.extract_strided_slice %4 {offsets = [0, 0, 92], sizes = [1, 8, 4], strides = [1, 1, 1]} : vector<1x8x96xf32> to vector<1x8x4xf32>
    "tpu.trace_start"() <{level = 10 : i32, message = "bqd,bkd->bqk"}> : () -> ()
    %cst_32 = arith.constant dense<0.000000e+00> : vector<1x8x8xf32>
    %113 = tpu.matmul %110, %111, %cst_32 {dimension_numbers = #tpu.dot_dimension_numbers<[2], [2], [1], [1], [0, 0, 0, 1, 1, 1], [0], [0]>} : vector<1x8x4xf32>, vector<1x8x4xf32>, vector<1x8x8xf32> -> vector<1x8x8xf32>
    "tpu.trace_stop"() : () -> ()
    %cst_33 = arith.constant dense<0xFF800000> : vector<1x8xf32>
    %114 = vector.multi_reduction <maximumf>, %113, %cst_33 [2] : vector<1x8x8xf32> to vector<1x8xf32>
    %115 = vector.shape_cast %114 : vector<1x8xf32> to vector<1x8x1xf32>
    %116 = vector.broadcast %115 : vector<1x8x1xf32> to vector<1x8x8xf32>
    %117 = arith.subf %113, %116 : vector<1x8x8xf32>
    %118 = math.exp %117 : vector<1x8x8xf32>
    %cst_34 = arith.constant dense<0.000000e+00> : vector<1x8xf32>
    %119 = vector.multi_reduction <add>, %118, %cst_34 [2] : vector<1x8x8xf32> to vector<1x8xf32>
    %120 = vector.shape_cast %119 : vector<1x8xf32> to vector<1x8x1xf32>
    %121 = tpu.reciprocal %120 : vector<1x8x1xf32> -> vector<1x8x1xf32>
    %122 = vector.broadcast %121 : vector<1x8x1xf32> to vector<1x8x8xf32>
    %123 = arith.mulf %118, %122 : vector<1x8x8xf32>
    "tpu.trace_start"() <{level = 10 : i32, message = "bqk,bkd->bqd"}> : () -> ()
    %cst_35 = arith.constant dense<0.000000e+00> : vector<1x8x4xf32>
    %124 = tpu.matmul %123, %112, %cst_35 {dimension_numbers = #tpu.dot_dimension_numbers<[2], [1], [1], [2], [0, 0, 0, 1, 1, 2], [0], [0]>} : vector<1x8x8xf32>, vector<1x8x4xf32>, vector<1x8x4xf32> -> vector<1x8x4xf32>
    "tpu.trace_stop"() : () -> ()
    %125 = tpu.concatenate %19, %34, %49, %64, %79, %94, %109, %124 in 2 : vector<1x8x4xf32>, vector<1x8x4xf32>, vector<1x8x4xf32>, vector<1x8x4xf32>, vector<1x8x4xf32>, vector<1x8x4xf32>, vector<1x8x4xf32>, vector<1x8x4xf32> -> vector<1x8x32xf32>
    %126 = vector.shape_cast %125 : vector<1x8x32xf32> to vector<8x32xf32>
    %c0_36 = arith.constant 0 : index
    %c0_37 = arith.constant 0 : index
    %127 = vector.load %arg3[%c0_36, %c0_37] : memref<33x32xf32, #tpu.memory_space<vmem>>, vector<32x32xf32>
    %cst_38 = arith.constant dense<0.000000e+00> : vector<8x32xf32>
    %128 = tpu.matmul %126, %127, %cst_38 {dimension_numbers = #tpu.dot_dimension_numbers<[1], [0], [0], [1], [0, 0, 1, 1], [], []>} : vector<8x32xf32>, vector<32x32xf32>, vector<8x32xf32> -> vector<8x32xf32>
    %c32 = arith.constant 32 : index
    %c0_39 = arith.constant 0 : index
    %129 = vector.load %arg3[%c32, %c0_39] : memref<33x32xf32, #tpu.memory_space<vmem>>, vector<1x32xf32>
    %130 = vector.broadcast %129 : vector<1x32xf32> to vector<8x32xf32>
    %131 = arith.addf %128, %130 : vector<8x32xf32>
    %132 = vector.shape_cast %131 : vector<8x32xf32> to vector<1x8x32xf32>
    %c0_40 = arith.constant 0 : index
    %c0_41 = arith.constant 0 : index
    %c0_42 = arith.constant 0 : index
    %133 = vector.load %arg4[%c0_40, %c0_41, %c0_42] : memref<1x8x32xf32, #tpu.memory_space<vmem>>, vector<1x8x32xf32>
    tpu.vector_store %arg4[%c0_40, %c0_41, %c0_42], %132 {strides = array<i32>} : memref<1x8x32xf32, #tpu.memory_space<vmem>>, vector<1x8x32xf32>,
    return
  }
  func.func @transform_0(%arg0: i32) -> (i32, i32, i32) {
    %c0_i32 = arith.constant 0 : i32
    %c0_i32_0 = arith.constant 0 : i32
    %c0_i32_1 = arith.constant 0 : i32
    return %arg0, %c0_i32, %c0_i32_0 : i32, i32, i32
  }
  func.func @transform_1(%arg0: i32) -> (i32, i32) {
    %c0_i32 = arith.constant 0 : i32
    %c0_i32_0 = arith.constant 0 : i32
    %c0_i32_1 = arith.constant 0 : i32
    return %c0_i32, %c0_i32_0 : i32, i32
  }
  func.func @transform_2(%arg0: i32) -> (i32, i32) {
    %c0_i32 = arith.constant 0 : i32
    %c0_i32_0 = arith.constant 0 : i32
    %c0_i32_1 = arith.constant 0 : i32
    return %c0_i32, %c0_i32_0 : i32, i32
  }
  func.func @transform_3(%arg0: i32) -> (i32, i32, i32) {
    %c0_i32 = arith.constant 0 : i32
    %c0_i32_0 = arith.constant 0 : i32
    %c0_i32_1 = arith.constant 0 : i32
    return %arg0, %c0_i32, %c0_i32_0 : i32, i32, i32
  }
}

</mosaic_0001>

<llo_original>
// kernel: tpu_custom_call.1
$region0: #{tpu_custom_call.1}
  #allocation0 [shape = 'u32[]', space=smem, size = 0x4, offset = 0x4, fixed_abs, tag = 'smem constant byte address 0x4 - core index']
  #allocation1 [shape = 'u32[72,128]{1,0:T(1,128)}', space=vmem, size = 0x9000, scoped, tag = 'internal scratch']
  %s0 = inlined_call_operand.vmem [shape: f32[2,8,32], index: 0, kind: input, shape index: {}]
  %s1 = inlined_call_operand.vmem [shape: f32[32,96], index: 1, kind: input, shape index: {}]
  %s2 = inlined_call_operand.vmem [shape: f32[33,32], index: 2, kind: input, shape index: {}]
  %s3 = inlined_call_operand.hbm [shape: f32[2,8,32], index: 3, kind: output, shape index: {}]
  %s4 = sld [smem:[#allocation0]]
  $region45: #{tpu_custom_call.1} parent=0
    _
  %s6 = ssub.s32 1, %s4
  %s7 = scalar_select 0, %s6, %s4
  $region1: #{tpu_custom_call.1} parent=0
    #allocation2 [shape = 'u8[8192]{0}', space=vmem, size = 0x2000, scoped, tag = 'output window, operand 0']
    #allocation3 [shape = 's32[2]{0}', space=sflag, size = 0x8, scoped, tag = 'scoped memory for tpu_custom_call.1']
    %8 = vsyncpa [#allocation3], 0
    %s9 = scalar_lea.sflag [#allocation3], 1
    %10 = vsyncpa %s9, 0
    loop: start=0, step=1, limit=4
    $region2: #{tpu_custom_call.1} parent=1 // loop_pre_header
      _
    $region3: #{tpu_custom_call.1} parent=1 // loop_header
      %s12 = sphi 0, %s16
      %p13 = scmp.ge.s32.totalorder %s12, 4
      %s22 = sphi 0, %s24
      %s25 = sphi 0, %s22
      %s26 = sphi 0, %s25
      %s42 = sphi 0, %s26
      %s46 = sphi 0, %s46
      %s48 = sphi 0, %s46
      %s49 = sphi 0, %s48
      %s63 = sphi 0, %s49
      %s67 = sphi 0, %s67
      %s69 = sphi 0, %s67
      %s70 = sphi 0, %s69
      %s84 = sphi 0, %s70
      %s90 = sphi 0, %s92
      %s93 = sphi 0, %s90
      %s94 = sphi 0, %s93
      %s110 = sphi 0, %s94
    $region4: #{tpu_custom_call.1} parent=1 // loop_header_branch
      %15 = sbr.rel (%p13) target = $region8
    $region5: #{tpu_custom_call.1} parent=1 // loop_body
      %s17 = ssub.s32 %s12, 1
      %s18 = ssub.s32 %s12, 2
      %s19 = sadd.s32 %s12, 1
      %s20 = ssub.s32 %s12, %s19
      %p21 = scmp.eq.s32.totalorder %s20, 0
      %s23 = sadd.s32 %s22, 1
      %s24 = scalar_select %p21, %s22, %s23
      %p27 = pneg %p21
      %p28 = scmp.eq.s32.totalorder %s12, 1
      %p29 = por %p27, %p28
      %p30 = scmp.ne.s32.totalorder %s22, %s25
      %p31 = scmp.eq.s32.totalorder %s12, 0
      %p32 = por %p30, %p31
      %p33 = scmp.ne.s32.totalorder %s22, %s25
      %p34 = scmp.eq.s32.totalorder %s17, 1
      %p35 = por %p33, %p34
      %p36 = scmp.ne.s32.totalorder %s25, %s26
      %p37 = scmp.eq.s32.totalorder %s17, 0
      %p38 = por %p36, %p37
      %p39 = scmp.ne.s32.totalorder %s25, %s26
      %p40 = scmp.eq.s32.totalorder %s18, 1
      %p41 = por %p39, %p40
      %p43 = scmp.ne.s32.totalorder %s26, %s42
      %p44 = scmp.eq.s32.totalorder %s18, 0
      %p45 = por %p43, %p44
      %s47 = sadd.s32 %s46, 1
      %p50 = scmp.eq.s32.totalorder %s12, 1
      %p51 = scmp.ne.s32.totalorder %s46, %s48
      %p52 = scmp.eq.s32.totalorder %s12, 0
      %p53 = por %p51, %p52
      %p54 = scmp.ne.s32.totalorder %s46, %s48
      %p55 = scmp.eq.s32.totalorder %s17, 1
      %p56 = por %p54, %p55
      %p57 = scmp.ne.s32.totalorder %s48, %s49
      %p58 = scmp.eq.s32.totalorder %s17, 0
      %p59 = por %p57, %p58
      %p60 = scmp.ne.s32.totalorder %s48, %s49
      %p61 = scmp.eq.s32.totalorder %s18, 1
      %p62 = por %p60, %p61
      %p64 = scmp.ne.s32.totalorder %s49, %s63
      %p65 = scmp.eq.s32.totalorder %s18, 0
      %p66 = por %p64, %p65
      %s68 = sadd.s32 %s67, 1
      %p71 = scmp.eq.s32.totalorder %s12, 1
      %p72 = scmp.ne.s32.totalorder %s67, %s69
      %p73 = scmp.eq.s32.totalorder %s12, 0
      %p74 = por %p72, %p73
      %p75 = scmp.ne.s32.totalorder %s67, %s69
      %p76 = scmp.eq.s32.totalorder %s17, 1
      %p77 = por %p75, %p76
      %p78 = scmp.ne.s32.totalorder %s69, %s70
      %p79 = scmp.eq.s32.totalorder %s17, 0
      %p80 = por %p78, %p79
      %p81 = scmp.ne.s32.totalorder %s69, %s70
      %p82 = scmp.eq.s32.totalorder %s18, 1
      %p83 = por %p81, %p82
      %p85 = scmp.ne.s32.totalorder %s70, %s84
      %p86 = scmp.eq.s32.totalorder %s18, 0
      %p87 = por %p85, %p86
      %s88 = ssub.s32 %s12, %s19
      %p89 = scmp.eq.s32.totalorder %s88, 0
      %s91 = sadd.s32 %s90, 1
      %s92 = scalar_select %p89, %s90, %s91
      %p95 = pneg %p89
      %p96 = scmp.eq.s32.totalorder %s12, 1
      %p97 = por %p95, %p96
      %p98 = scmp.ne.s32.totalorder %s90, %s93
      %p99 = scmp.eq.s32.totalorder %s12, 0
      %p100 = por %p98, %p99
      %p101 = scmp.ne.s32.totalorder %s90, %s93
      %p102 = scmp.eq.s32.totalorder %s17, 1
      %p103 = por %p101, %p102
      %p104 = scmp.ne.s32.totalorder %s93, %s94
      %p105 = scmp.eq.s32.totalorder %s17, 0
      %p106 = por %p104, %p105
      %p107 = scmp.ne.s32.totalorder %s93, %s94
      %p108 = scmp.eq.s32.totalorder %s18, 1
      %p109 = por %p107, %p108
      %p111 = scmp.ne.s32.totalorder %s94, %s110
      %p112 = scmp.eq.s32.totalorder %s18, 0
      %p113 = por %p111, %p112
      %p114 = scmp.le.s32.totalorder 1, %s12
      %p115 = scmp.lt.s32.totalorder %s12, 3
      %p116 = pnand %p114, %p115
      %p117 = pneg %p116
      // Predicated region
      $region9: #{tpu_custom_call.1} parent=5 // pred_check
        _
      $region10: #{tpu_custom_call.1} parent=5 // pred_check_branch
        %119 = sbr.rel (%p116) target = $region12
      $region11: #{tpu_custom_call.1} parent=5 // pred_region
        %s120 = ssub.s32 %s12, 1
        // Predicated region
        $region13: #{tpu_custom_call.1} parent=11 // pred_check
          %p121 = pneg %p59
        $region14: #{tpu_custom_call.1} parent=11 // pred_check_branch
          %123 = sbr.rel (%p121) target = $region16
        $region15: #{tpu_custom_call.1} parent=11 // pred_region
          _
        $region16: #{tpu_custom_call.1} parent=11 // pred_fallthru
          _
        // Predicated region
        $region17: #{tpu_custom_call.1} parent=11 // pred_check
          %p124 = pneg %p80
        $region18: #{tpu_custom_call.1} parent=11 // pred_check_branch
          %126 = sbr.rel (%p124) target = $region20
        $region19: #{tpu_custom_call.1} parent=11 // pred_region
          _
        $region20: #{tpu_custom_call.1} parent=11 // pred_fallthru
          _
      $region12: #{tpu_custom_call.1} parent=5 // pred_fallthru
        _
      %p127 = scmp.lt.s32.totalorder %s12, 2
      // Predicated region
      $region21: #{tpu_custom_call.1} parent=5 // pred_check
        %p128 = pneg %p127
      $region22: #{tpu_custom_call.1} parent=5 // pred_check_branch
        %130 = sbr.rel (%p128) target = $region24
      $region23: #{tpu_custom_call.1} parent=5 // pred_region
        // Predicated region
        $region25: #{tpu_custom_call.1} parent=23 // pred_check
          %p131 = pneg %p32
        $region26: #{tpu_custom_call.1} parent=23 // pred_check_branch
          %133 = sbr.rel (%p131) target = $region28
        $region27: #{tpu_custom_call.1} parent=23 // pred_region
          %p134 = scmp.lt.s32.totalorder %s12, 1
          %s135 = scalar_select %p134, %s12, 1
          %s136 = smul.addr %s135, 8
          %s137 = scalar_lea.vmem %s0, %s136
        $region28: #{tpu_custom_call.1} parent=23 // pred_fallthru
          _
      $region24: #{tpu_custom_call.1} parent=5 // pred_fallthru
        _
      %p138 = scmp.le.s32.totalorder 1, %s12
      %p139 = scmp.lt.s32.totalorder %s12, 3
      %p140 = pnand %p138, %p139
      %p141 = pneg %p140
      // Predicated region
      $region29: #{tpu_custom_call.1} parent=5 // pred_check
        _
      $region30: #{tpu_custom_call.1} parent=5 // pred_check_branch
        %143 = sbr.rel (%p140) target = $region32
      $region31: #{tpu_custom_call.1} parent=5 // pred_region
        %s144 = ssub.s32 %s12, 1
        %p145 = scmp.lt.s32.totalorder %s17, 1
        %s146 = scalar_select %p145, %s17, 1
        %s147 = smul.addr %s146, 8
        %s148 = scalar_lea.vmem %s0, %s147
        %p149 = pneg %p38
        %p150 = pneg %p35
        %p151 = pneg %p59
        %p152 = pneg %p56
        %p153 = pneg %p80
        %p154 = pneg %p77
        %p155 = pneg %p106
        %p156 = pneg %p103
        %s157 = sand.u32 %s93, 1
        %s158 = scalar_lea.sflag [#allocation3], %s157
        %s159 = sand.u32 %s93, 1
        %s160 = smul.addr %s159, 8
        %s161 = scalar_lea.vmem [#allocation2], %s160
        %p162 = scmp.lt.s32.totalorder %s17, 1
        %s163 = scalar_select %p162, %s17, 1
        %s164 = smul.addr %s163, 8
        %s165 = scalar_lea.vmem %s0, %s164
        %v166 = vld [vmem:[%s165] sm:$0xff]
        %v167 = vld [vmem:[%s1] sm:$0xff]
        %v168 = vld [vmem:[%s1 + $0x8] sm:$0xff]
        %v169 = vld [vmem:[%s1 + $0x10] sm:$0xff]
        %v170 = vld [vmem:[%s1 + $0x18] sm:$0xff]
        %vm171 = vcmask 261120
        %v173 = vsel %vm171, %v166, 0
        %175 = vmatpush.msra.mxu0 0.0
        %176 = vmatpush.msra.mxu0 0.0
        %177 = vmatpush.msra.mxu0 0.0
        %178 = vmatpush.msra.mxu0 0.0
        %179 = vmatpush.msra.mxu0 0.0
        %180 = vmatpush.msra.mxu0 0.0
        %181 = vmatpush.msra.mxu0 0.0
        %182 = vmatpush.msra.mxu0 0.0
        %183 = vmatpush.msra.mxu0 0.0
        %184 = vmatpush.msra.mxu0 0.0
        %185 = vmatpush.msra.mxu0 0.0
        %186 = vmatpush.msra.mxu0 0.0
        %187 = vmatpush.msra.mxu0 %v170
        %188 = vmatpush.msra.mxu0 %v169
        %189 = vmatpush.msra.mxu0 %v168
        %190 = vmatpush.msra.mxu0 %v167
        %191 = vmatmul.f32.gmra.mxu0 %v173
        %v192 = vpop.f32.mrf.mxu0
        %v193 = vadd.f32 0.0, %v192
        %194 = vdwg.mxu0
        %196 = vrot.lane.b32.xlu0 %v193, 96
        %v197 = vpop.permute.xlu0 %196
        %vm198 = vcmask 31744
        %v199 = vsel %vm198, %v193, 0
        %v201 = vsel %vm198, %v197, 0
        %203 = vmatpush.xpose.msra.mxu0 0.0
        %204 = vmatpush.xpose.msra.mxu0 0.0
        %205 = vmatpush.xpose.msra.mxu0 0.0
        %206 = vmatpush.xpose.msra.mxu0 0.0
        %207 = vmatpush.xpose.msra.mxu0 0.0
        %208 = vmatpush.xpose.msra.mxu0 0.0
        %209 = vmatpush.xpose.msra.mxu0 0.0
        %210 = vmatpush.xpose.msra.mxu0 0.0
        %211 = vmatpush.xpose.msra.mxu0 0.0
        %212 = vmatpush.xpose.msra.mxu0 0.0
        %213 = vmatpush.xpose.msra.mxu0 0.0
        %214 = vmatpush.xpose.msra.mxu0 0.0
        %215 = vmatpush.xpose.msra.mxu0 0.0
        %216 = vmatpush.xpose.msra.mxu0 0.0
        %217 = vmatpush.xpose.msra.mxu0 0.0
        %218 = vmatpush.xpose.msra.mxu0 %v201
        %219 = vmatmul.f32.gmra.mxu0 %v199
        %v220 = vpop.f32.mrf.mxu0
        %v221 = vadd.f32 0.0, %v220
        %222 = vdwg.mxu0
        %vm223 = vcmask 64512
        %v224 = vsel %vm223, %v221, -inf
        %225 = vmax.xlane.f32.xlu0 %v224
        %v226 = vpop.xlane.xlu0 %225
        %v227 = vsub.f32 %v221, %v226
        %v228 = vmul.f32 %v227, 1.442695
        %v229 = vpow.pop %v228
        %v230 = vsel %vm223, %v229, 0.0
        %231 = vadd.xlane.f32.xlu0 %v230
        %v232 = vpop.xlane.xlu0 %231
        %v233 = vrcp.pop %v232
        %v234 = vmul.f32 %v232, %v233
        %v235 = vsub.f32 1.0, %v234
        %v236 = vmul.f32 %v233, %v235
        %v237 = vadd.f32 %v233, %v236
        %vm238 = vweird.f32 %v232
        %vm239 = vweird.f32 %v233
        %vm240 = vmor %vm238, %vm239
        %v241 = vsel %vm240, %v233, %v237
        %v242 = vand.u32 2147483647, %v232
        %vm243 = vcmp.eq.f32.partialorder %v242, 8.507059e+37
        %v244 = vand.u32 %v232, 2147483648
        %v245 = vor.u32 1.1754944e-38, %v244
        %v246 = vsel %vm243, %v245, %v241
        %v247 = vmul.f32 %v229, %v246
        %248 = vrot.lane.b32.xlu0 %v193, 64
        %v249 = vpop.permute.xlu0 %248
        %v252 = vsel %vm223, %v247, 0
        %254 = vmatpush.msra.mxu0 0.0
        %255 = vmatpush.msra.mxu0 0.0
        %256 = vmatpush.msra.mxu0 0.0
        %257 = vmatpush.msra.mxu0 0.0
        %258 = vmatpush.msra.mxu0 0.0
        %259 = vmatpush.msra.mxu0 0.0
        %260 = vmatpush.msra.mxu0 0.0
        %261 = vmatpush.msra.mxu0 0.0
        %262 = vmatpush.msra.mxu0 0.0
        %263 = vmatpush.msra.mxu0 0.0
        %264 = vmatpush.msra.mxu0 0.0
        %265 = vmatpush.msra.mxu0 0.0
        %266 = vmatpush.msra.mxu0 0.0
        %267 = vmatpush.msra.mxu0 0.0
        %268 = vmatpush.msra.mxu0 0.0
        %269 = vmatpush.msra.mxu0 %v249
        %270 = vmatmul.f32.gmra.mxu0 %v252
        %v271 = vpop.f32.mrf.mxu0
        %v272 = vadd.f32 0.0, %v271
        %273 = vdwg.mxu0
        %274 = vrot.lane.b32.xlu0 %v193, 124
        %v275 = vpop.permute.xlu0 %274
        %276 = vrot.lane.b32.xlu0 %v193, 92
        %v277 = vpop.permute.xlu0 %276
        %v278 = vsel %vm198, %v275, 0
        %v280 = vsel %vm198, %v277, 0
        %282 = vmatpush.xpose.msra.mxu0 0.0
        %283 = vmatpush.xpose.msra.mxu0 0.0
        %284 = vmatpush.xpose.msra.mxu0 0.0
        %285 = vmatpush.xpose.msra.mxu0 0.0
        %286 = vmatpush.xpose.msra.mxu0 0.0
        %287 = vmatpush.xpose.msra.mxu0 0.0
        %288 = vmatpush.xpose.msra.mxu0 0.0
        %289 = vmatpush.xpose.msra.mxu0 0.0
        %290 = vmatpush.xpose.msra.mxu0 0.0
        %291 = vmatpush.xpose.msra.mxu0 0.0
        %292 = vmatpush.xpose.msra.mxu0 0.0
        %293 = vmatpush.xpose.msra.mxu0 0.0
        %294 = vmatpush.xpose.msra.mxu0 0.0
        %295 = vmatpush.xpose.msra.mxu0 0.0
        %296 = vmatpush.xpose.msra.mxu0 0.0
        %297 = vmatpush.xpose.msra.mxu0 %v280
        %298 = vmatmul.f32.gmra.mxu0 %v278
        %v299 = vpop.f32.mrf.mxu0
        %v300 = vadd.f32 0.0, %v299
        %301 = vdwg.mxu0
        %v302 = vsel %vm223, %v300, -inf
        %303 = vmax.xlane.f32.xlu0 %v302
        %v304 = vpop.xlane.xlu0 %303
        %v305 = vsub.f32 %v300, %v304
        %v306 = vmul.f32 %v305, 1.442695
        %v307 = vpow.pop %v306
        %v308 = vsel %vm223, %v307, 0.0
        %309 = vadd.xlane.f32.xlu0 %v308
        %v310 = vpop.xlane.xlu0 %309
        %v311 = vrcp.pop %v310
        %v312 = vmul.f32 %v310, %v311
        %v313 = vsub.f32 1.0, %v312
        %v314 = vmul.f32 %v311, %v313
        %v315 = vadd.f32 %v311, %v314
        %vm316 = vweird.f32 %v310
        %vm317 = vweird.f32 %v311
        %vm318 = vmor %vm316, %vm317
        %v319 = vsel %vm318, %v311, %v315
        %v320 = vand.u32 2147483647, %v310
        %vm321 = vcmp.eq.f32.partialorder %v320, 8.507059e+37
        %v322 = vand.u32 %v310, 2147483648
        %v323 = vor.u32 1.1754944e-38, %v322
        %v324 = vsel %vm321, %v323, %v319
        %v325 = vmul.f32 %v307, %v324
        %326 = vrot.lane.b32.xlu0 %v193, 60
        %v327 = vpop.permute.xlu0 %326
        %v330 = vsel %vm223, %v325, 0
        %332 = vmatpush.msra.mxu0 0.0
        %333 = vmatpush.msra.mxu0 0.0
        %334 = vmatpush.msra.mxu0 0.0
        %335 = vmatpush.msra.mxu0 0.0
        %336 = vmatpush.msra.mxu0 0.0
        %337 = vmatpush.msra.mxu0 0.0
        %338 = vmatpush.msra.mxu0 0.0
        %339 = vmatpush.msra.mxu0 0.0
        %340 = vmatpush.msra.mxu0 0.0
        %341 = vmatpush.msra.mxu0 0.0
        %342 = vmatpush.msra.mxu0 0.0
        %343 = vmatpush.msra.mxu0 0.0
        %344 = vmatpush.msra.mxu0 0.0
        %345 = vmatpush.msra.mxu0 0.0
        %346 = vmatpush.msra.mxu0 0.0
        %347 = vmatpush.msra.mxu0 %v327
        %348 = vmatmul.f32.gmra.mxu0 %v330
        %v349 = vpop.f32.mrf.mxu0
        %v350 = vadd.f32 0.0, %v349
        %351 = vdwg.mxu0
        %352 = vrot.lane.b32.xlu0 %v193, 120
        %v353 = vpop.permute.xlu0 %352
        %354 = vrot.lane.b32.xlu0 %v193, 88
        %v355 = vpop.permute.xlu0 %354
        %v356 = vsel %vm198, %v353, 0
        %v358 = vsel %vm198, %v355, 0
        %360 = vmatpush.xpose.msra.mxu0 0.0
        %361 = vmatpush.xpose.msra.mxu0 0.0
        %362 = vmatpush.xpose.msra.mxu0 0.0
        %363 = vmatpush.xpose.msra.mxu0 0.0
        %364 = vmatpush.xpose.msra.mxu0 0.0
        %365 = vmatpush.xpose.msra.mxu0 0.0
        %366 = vmatpush.xpose.msra.mxu0 0.0
        %367 = vmatpush.xpose.msra.mxu0 0.0
        %368 = vmatpush.xpose.msra.mxu0 0.0
        %369 = vmatpush.xpose.msra.mxu0 0.0
        %370 = vmatpush.xpose.msra.mxu0 0.0
        %371 = vmatpush.xpose.msra.mxu0 0.0
        %372 = vmatpush.xpose.msra.mxu0 0.0
        %373 = vmatpush.xpose.msra.mxu0 0.0
        %374 = vmatpush.xpose.msra.mxu0 0.0
        %375 = vmatpush.xpose.msra.mxu0 %v358
        %376 = vmatmul.f32.gmra.mxu0 %v356
        %v377 = vpop.f32.mrf.mxu0
        %v378 = vadd.f32 0.0, %v377
        %379 = vdwg.mxu0
        %v380 = vsel %vm223, %v378, -inf
        %381 = vmax.xlane.f32.xlu0 %v380
        %v382 = vpop.xlane.xlu0 %381
        %v383 = vsub.f32 %v378, %v382
        %v384 = vmul.f32 %v383, 1.442695
        %v385 = vpow.pop %v384
        %v386 = vsel %vm223, %v385, 0.0
        %387 = vadd.xlane.f32.xlu0 %v386
        %v388 = vpop.xlane.xlu0 %387
        %v389 = vrcp.pop %v388
        %v390 = vmul.f32 %v388, %v389
        %v391 = vsub.f32 1.0, %v390
        %v392 = vmul.f32 %v389, %v391
        %v393 = vadd.f32 %v389, %v392
        %vm394 = vweird.f32 %v388
        %vm395 = vweird.f32 %v389
        %vm396 = vmor %vm394, %vm395
        %v397 = vsel %vm396, %v389, %v393
        %v398 = vand.u32 2147483647, %v388
        %vm399 = vcmp.eq.f32.partialorder %v398, 8.507059e+37
        %v400 = vand.u32 %v388, 2147483648
        %v401 = vor.u32 1.1754944e-38, %v400
        %v402 = vsel %vm399, %v401, %v397
        %v403 = vmul.f32 %v385, %v402
        %404 = vrot.lane.b32.xlu0 %v193, 56
        %v405 = vpop.permute.xlu0 %404
        %v408 = vsel %vm223, %v403, 0
        %410 = vmatpush.msra.mxu0 0.0
        %411 = vmatpush.msra.mxu0 0.0
        %412 = vmatpush.msra.mxu0 0.0
        %413 = vmatpush.msra.mxu0 0.0
        %414 = vmatpush.msra.mxu0 0.0
        %415 = vmatpush.msra.mxu0 0.0
        %416 = vmatpush.msra.mxu0 0.0
        %417 = vmatpush.msra.mxu0 0.0
        %418 = vmatpush.msra.mxu0 0.0
        %419 = vmatpush.msra.mxu0 0.0
        %420 = vmatpush.msra.mxu0 0.0
        %421 = vmatpush.msra.mxu0 0.0
        %422 = vmatpush.msra.mxu0 0.0
        %423 = vmatpush.msra.mxu0 0.0
        %424 = vmatpush.msra.mxu0 0.0
        %425 = vmatpush.msra.mxu0 %v405
        %426 = vmatmul.f32.gmra.mxu0 %v408
        %v427 = vpop.f32.mrf.mxu0
        %v428 = vadd.f32 0.0, %v427
        %429 = vdwg.mxu0
        %430 = vrot.lane.b32.xlu0 %v193, 116
        %v431 = vpop.permute.xlu0 %430
        %432 = vrot.lane.b32.xlu0 %v193, 84
        %v433 = vpop.permute.xlu0 %432
        %v434 = vsel %vm198, %v431, 0
        %v436 = vsel %vm198, %v433, 0
        %438 = vmatpush.xpose.msra.mxu0 0.0
        %439 = vmatpush.xpose.msra.mxu0 0.0
        %440 = vmatpush.xpose.msra.mxu0 0.0
        %441 = vmatpush.xpose.msra.mxu0 0.0
        %442 = vmatpush.xpose.msra.mxu0 0.0
        %443 = vmatpush.xpose.msra.mxu0 0.0
        %444 = vmatpush.xpose.msra.mxu0 0.0
        %445 = vmatpush.xpose.msra.mxu0 0.0
        %446 = vmatpush.xpose.msra.mxu0 0.0
        %447 = vmatpush.xpose.msra.mxu0 0.0
        %448 = vmatpush.xpose.msra.mxu0 0.0
        %449 = vmatpush.xpose.msra.mxu0 0.0
        %450 = vmatpush.xpose.msra.mxu0 0.0
        %451 = vmatpush.xpose.msra.mxu0 0.0
        %452 = vmatpush.xpose.msra.mxu0 0.0
        %453 = vmatpush.xpose.msra.mxu0 %v436
        %454 = vmatmul.f32.gmra.mxu0 %v434
        %v455 = vpop.f32.mrf.mxu0
        %v456 = vadd.f32 0.0, %v455
        %457 = vdwg.mxu0
        %v458 = vsel %vm223, %v456, -inf
        %459 = vmax.xlane.f32.xlu0 %v458
        %v460 = vpop.xlane.xlu0 %459
        %v461 = vsub.f32 %v456, %v460
        %v462 = vmul.f32 %v461, 1.442695
        %v463 = vpow.pop %v462
        %v464 = vsel %vm223, %v463, 0.0
        %465 = vadd.xlane.f32.xlu0 %v464
        %v466 = vpop.xlane.xlu0 %465
        %v467 = vrcp.pop %v466
        %v468 = vmul.f32 %v466, %v467
        %v469 = vsub.f32 1.0, %v468
        %v470 = vmul.f32 %v467, %v469
        %v471 = vadd.f32 %v467, %v470
        %vm472 = vweird.f32 %v466
        %vm473 = vweird.f32 %v467
        %vm474 = vmor %vm472, %vm473
        %v475 = vsel %vm474, %v467, %v471
        %v476 = vand.u32 2147483647, %v466
        %vm477 = vcmp.eq.f32.partialorder %v476, 8.507059e+37
        %v478 = vand.u32 %v466, 2147483648
        %v479 = vor.u32 1.1754944e-38, %v478
        %v480 = vsel %vm477, %v479, %v475
        %v481 = vmul.f32 %v463, %v480
        %482 = vrot.lane.b32.xlu0 %v193, 52
        %v483 = vpop.permute.xlu0 %482
        %v486 = vsel %vm223, %v481, 0
        %488 = vmatpush.msra.mxu0 0.0
        %489 = vmatpush.msra.mxu0 0.0
        %490 = vmatpush.msra.mxu0 0.0
        %491 = vmatpush.msra.mxu0 0.0
        %492 = vmatpush.msra.mxu0 0.0
        %493 = vmatpush.msra.mxu0 0.0
        %494 = vmatpush.msra.mxu0 0.0
        %495 = vmatpush.msra.mxu0 0.0
        %496 = vmatpush.msra.mxu0 0.0
        %497 = vmatpush.msra.mxu0 0.0
        %498 = vmatpush.msra.mxu0 0.0
        %499 = vmatpush.msra.mxu0 0.0
        %500 = vmatpush.msra.mxu0 0.0
        %501 = vmatpush.msra.mxu0 0.0
        %502 = vmatpush.msra.mxu0 0.0
        %503 = vmatpush.msra.mxu0 %v483
        %504 = vmatmul.f32.gmra.mxu0 %v486
        %v505 = vpop.f32.mrf.mxu0
        %v506 = vadd.f32 0.0, %v505
        %507 = vdwg.mxu0
        %508 = vrot.lane.b32.xlu0 %v193, 112
        %v509 = vpop.permute.xlu0 %508
        %510 = vrot.lane.b32.xlu0 %v193, 80
        %v511 = vpop.permute.xlu0 %510
        %v512 = vsel %vm198, %v509, 0
        %v514 = vsel %vm198, %v511, 0
        %516 = vmatpush.xpose.msra.mxu0 0.0
        %517 = vmatpush.xpose.msra.mxu0 0.0
        %518 = vmatpush.xpose.msra.mxu0 0.0
        %519 = vmatpush.xpose.msra.mxu0 0.0
        %520 = vmatpush.xpose.msra.mxu0 0.0
        %521 = vmatpush.xpose.msra.mxu0 0.0
        %522 = vmatpush.xpose.msra.mxu0 0.0
        %523 = vmatpush.xpose.msra.mxu0 0.0
        %524 = vmatpush.xpose.msra.mxu0 0.0
        %525 = vmatpush.xpose.msra.mxu0 0.0
        %526 = vmatpush.xpose.msra.mxu0 0.0
        %527 = vmatpush.xpose.msra.mxu0 0.0
        %528 = vmatpush.xpose.msra.mxu0 0.0
        %529 = vmatpush.xpose.msra.mxu0 0.0
        %530 = vmatpush.xpose.msra.mxu0 0.0
        %531 = vmatpush.xpose.msra.mxu0 %v514
        %532 = vmatmul.f32.gmra.mxu0 %v512
        %v533 = vpop.f32.mrf.mxu0
        %v534 = vadd.f32 0.0, %v533
        %535 = vdwg.mxu0
        %v536 = vsel %vm223, %v534, -inf
        %537 = vmax.xlane.f32.xlu0 %v536
        %v538 = vpop.xlane.xlu0 %537
        %v539 = vsub.f32 %v534, %v538
        %v540 = vmul.f32 %v539, 1.442695
        %v541 = vpow.pop %v540
        %v542 = vsel %vm223, %v541, 0.0
        %543 = vadd.xlane.f32.xlu0 %v542
        %v544 = vpop.xlane.xlu0 %543
        %v545 = vrcp.pop %v544
        %v546 = vmul.f32 %v544, %v545
        %v547 = vsub.f32 1.0, %v546
        %v548 = vmul.f32 %v545, %v547
        %v549 = vadd.f32 %v545, %v548
        %vm550 = vweird.f32 %v544
        %vm551 = vweird.f32 %v545
        %vm552 = vmor %vm550, %vm551
        %v553 = vsel %vm552, %v545, %v549
        %v554 = vand.u32 2147483647, %v544
        %vm555 = vcmp.eq.f32.partialorder %v554, 8.507059e+37
        %v556 = vand.u32 %v544, 2147483648
        %v557 = vor.u32 1.1754944e-38, %v556
        %v558 = vsel %vm555, %v557, %v553
        %v559 = vmul.f32 %v541, %v558
        %560 = vrot.lane.b32.xlu0 %v193, 48
        %v561 = vpop.permute.xlu0 %560
        %v564 = vsel %vm223, %v559, 0
        %566 = vmatpush.msra.mxu0 0.0
        %567 = vmatpush.msra.mxu0 0.0
        %568 = vmatpush.msra.mxu0 0.0
        %569 = vmatpush.msra.mxu0 0.0
        %570 = vmatpush.msra.mxu0 0.0
        %571 = vmatpush.msra.mxu0 0.0
        %572 = vmatpush.msra.mxu0 0.0
        %573 = vmatpush.msra.mxu0 0.0
        %574 = vmatpush.msra.mxu0 0.0
        %575 = vmatpush.msra.mxu0 0.0
        %576 = vmatpush.msra.mxu0 0.0
        %577 = vmatpush.msra.mxu0 0.0
        %578 = vmatpush.msra.mxu0 0.0
        %579 = vmatpush.msra.mxu0 0.0
        %580 = vmatpush.msra.mxu0 0.0
        %581 = vmatpush.msra.mxu0 %v561
        %582 = vmatmul.f32.gmra.mxu0 %v564
        %v583 = vpop.f32.mrf.mxu0
        %v584 = vadd.f32 0.0, %v583
        %585 = vdwg.mxu0
        %586 = vrot.lane.b32.xlu0 %v193, 108
        %v587 = vpop.permute.xlu0 %586
        %588 = vrot.lane.b32.xlu0 %v193, 76
        %v589 = vpop.permute.xlu0 %588
        %v590 = vsel %vm198, %v587, 0
        %v592 = vsel %vm198, %v589, 0
        %594 = vmatpush.xpose.msra.mxu0 0.0
        %595 = vmatpush.xpose.msra.mxu0 0.0
        %596 = vmatpush.xpose.msra.mxu0 0.0
        %597 = vmatpush.xpose.msra.mxu0 0.0
        %598 = vmatpush.xpose.msra.mxu0 0.0
        %599 = vmatpush.xpose.msra.mxu0 0.0
        %600 = vmatpush.xpose.msra.mxu0 0.0
        %601 = vmatpush.xpose.msra.mxu0 0.0
        %602 = vmatpush.xpose.msra.mxu0 0.0
        %603 = vmatpush.xpose.msra.mxu0 0.0
        %604 = vmatpush.xpose.msra.mxu0 0.0
        %605 = vmatpush.xpose.msra.mxu0 0.0
        %606 = vmatpush.xpose.msra.mxu0 0.0
        %607 = vmatpush.xpose.msra.mxu0 0.0
        %608 = vmatpush.xpose.msra.mxu0 0.0
        %609 = vmatpush.xpose.msra.mxu0 %v592
        %610 = vmatmul.f32.gmra.mxu0 %v590
        %v611 = vpop.f32.mrf.mxu0
        %v612 = vadd.f32 0.0, %v611
        %613 = vdwg.mxu0
        %v614 = vsel %vm223, %v612, -inf
        %615 = vmax.xlane.f32.xlu0 %v614
        %v616 = vpop.xlane.xlu0 %615
        %v617 = vsub.f32 %v612, %v616
        %v618 = vmul.f32 %v617, 1.442695
        %v619 = vpow.pop %v618
        %v620 = vsel %vm223, %v619, 0.0
        %621 = vadd.xlane.f32.xlu0 %v620
        %v622 = vpop.xlane.xlu0 %621
        %v623 = vrcp.pop %v622
        %v624 = vmul.f32 %v622, %v623
        %v625 = vsub.f32 1.0, %v624
        %v626 = vmul.f32 %v623, %v625
        %v627 = vadd.f32 %v623, %v626
        %vm628 = vweird.f32 %v622
        %vm629 = vweird.f32 %v623
        %vm630 = vmor %vm628, %vm629
        %v631 = vsel %vm630, %v623, %v627
        %v632 = vand.u32 2147483647, %v622
        %vm633 = vcmp.eq.f32.partialorder %v632, 8.507059e+37
        %v634 = vand.u32 %v622, 2147483648
        %v635 = vor.u32 1.1754944e-38, %v634
        %v636 = vsel %vm633, %v635, %v631
        %v637 = vmul.f32 %v619, %v636
        %638 = vrot.lane.b32.xlu0 %v193, 44
        %v639 = vpop.permute.xlu0 %638
        %v642 = vsel %vm223, %v637, 0
        %644 = vmatpush.msra.mxu0 0.0
        %645 = vmatpush.msra.mxu0 0.0
        %646 = vmatpush.msra.mxu0 0.0
        %647 = vmatpush.msra.mxu0 0.0
        %648 = vmatpush.msra.mxu0 0.0
        %649 = vmatpush.msra.mxu0 0.0
        %650 = vmatpush.msra.mxu0 0.0
        %651 = vmatpush.msra.mxu0 0.0
        %652 = vmatpush.msra.mxu0 0.0
        %653 = vmatpush.msra.mxu0 0.0
        %654 = vmatpush.msra.mxu0 0.0
        %655 = vmatpush.msra.mxu0 0.0
        %656 = vmatpush.msra.mxu0 0.0
        %657 = vmatpush.msra.mxu0 0.0
        %658 = vmatpush.msra.mxu0 0.0
        %659 = vmatpush.msra.mxu0 %v639
        %660 = vmatmul.f32.gmra.mxu0 %v642
        %v661 = vpop.f32.mrf.mxu0
        %v662 = vadd.f32 0.0, %v661
        %663 = vdwg.mxu0
        %664 = vrot.lane.b32.xlu0 %v193, 104
        %v665 = vpop.permute.xlu0 %664
        %666 = vrot.lane.b32.xlu0 %v193, 72
        %v667 = vpop.permute.xlu0 %666
        %v668 = vsel %vm198, %v665, 0
        %v670 = vsel %vm198, %v667, 0
        %672 = vmatpush.xpose.msra.mxu0 0.0
        %673 = vmatpush.xpose.msra.mxu0 0.0
        %674 = vmatpush.xpose.msra.mxu0 0.0
        %675 = vmatpush.xpose.msra.mxu0 0.0
        %676 = vmatpush.xpose.msra.mxu0 0.0
        %677 = vmatpush.xpose.msra.mxu0 0.0
        %678 = vmatpush.xpose.msra.mxu0 0.0
        %679 = vmatpush.xpose.msra.mxu0 0.0
        %680 = vmatpush.xpose.msra.mxu0 0.0
        %681 = vmatpush.xpose.msra.mxu0 0.0
        %682 = vmatpush.xpose.msra.mxu0 0.0
        %683 = vmatpush.xpose.msra.mxu0 0.0
        %684 = vmatpush.xpose.msra.mxu0 0.0
        %685 = vmatpush.xpose.msra.mxu0 0.0
        %686 = vmatpush.xpose.msra.mxu0 0.0
        %687 = vmatpush.xpose.msra.mxu0 %v670
        %688 = vmatmul.f32.gmra.mxu0 %v668
        %v689 = vpop.f32.mrf.mxu0
        %v690 = vadd.f32 0.0, %v689
        %691 = vdwg.mxu0
        %v692 = vsel %vm223, %v690, -inf
        %693 = vmax.xlane.f32.xlu0 %v692
        %v694 = vpop.xlane.xlu0 %693
        %v695 = vsub.f32 %v690, %v694
        %v696 = vmul.f32 %v695, 1.442695
        %v697 = vpow.pop %v696
        %v698 = vsel %vm223, %v697, 0.0
        %699 = vadd.xlane.f32.xlu0 %v698
        %v700 = vpop.xlane.xlu0 %699
        %v701 = vrcp.pop %v700
        %v702 = vmul.f32 %v700, %v701
        %v703 = vsub.f32 1.0, %v702
        %v704 = vmul.f32 %v701, %v703
        %v705 = vadd.f32 %v701, %v704
        %vm706 = vweird.f32 %v700
        %vm707 = vweird.f32 %v701
        %vm708 = vmor %vm706, %vm707
        %v709 = vsel %vm708, %v701, %v705
        %v710 = vand.u32 2147483647, %v700
        %vm711 = vcmp.eq.f32.partialorder %v710, 8.507059e+37
        %v712 = vand.u32 %v700, 2147483648
        %v713 = vor.u32 1.1754944e-38, %v712
        %v714 = vsel %vm711, %v713, %v709
        %v715 = vmul.f32 %v697, %v714
        %716 = vrot.lane.b32.xlu0 %v193, 40
        %v717 = vpop.permute.xlu0 %716
        %v720 = vsel %vm223, %v715, 0
        %722 = vmatpush.msra.mxu0 0.0
        %723 = vmatpush.msra.mxu0 0.0
        %724 = vmatpush.msra.mxu0 0.0
        %725 = vmatpush.msra.mxu0 0.0
        %726 = vmatpush.msra.mxu0 0.0
        %727 = vmatpush.msra.mxu0 0.0
        %728 = vmatpush.msra.mxu0 0.0
        %729 = vmatpush.msra.mxu0 0.0
        %730 = vmatpush.msra.mxu0 0.0
        %731 = vmatpush.msra.mxu0 0.0
        %732 = vmatpush.msra.mxu0 0.0
        %733 = vmatpush.msra.mxu0 0.0
        %734 = vmatpush.msra.mxu0 0.0
        %735 = vmatpush.msra.mxu0 0.0
        %736 = vmatpush.msra.mxu0 0.0
        %737 = vmatpush.msra.mxu0 %v717
        %738 = vmatmul.f32.gmra.mxu0 %v720
        %v739 = vpop.f32.mrf.mxu0
        %v740 = vadd.f32 0.0, %v739
        %741 = vdwg.mxu0
        %742 = vrot.lane.b32.xlu0 %v193, 100
        %v743 = vpop.permute.xlu0 %742
        %744 = vrot.lane.b32.xlu0 %v193, 68
        %v745 = vpop.permute.xlu0 %744
        %v746 = vsel %vm198, %v743, 0
        %v748 = vsel %vm198, %v745, 0
        %750 = vmatpush.xpose.msra.mxu0 0.0
        %751 = vmatpush.xpose.msra.mxu0 0.0
        %752 = vmatpush.xpose.msra.mxu0 0.0
        %753 = vmatpush.xpose.msra.mxu0 0.0
        %754 = vmatpush.xpose.msra.mxu0 0.0
        %755 = vmatpush.xpose.msra.mxu0 0.0
        %756 = vmatpush.xpose.msra.mxu0 0.0
        %757 = vmatpush.xpose.msra.mxu0 0.0
        %758 = vmatpush.xpose.msra.mxu0 0.0
        %759 = vmatpush.xpose.msra.mxu0 0.0
        %760 = vmatpush.xpose.msra.mxu0 0.0
        %761 = vmatpush.xpose.msra.mxu0 0.0
        %762 = vmatpush.xpose.msra.mxu0 0.0
        %763 = vmatpush.xpose.msra.mxu0 0.0
        %764 = vmatpush.xpose.msra.mxu0 0.0
        %765 = vmatpush.xpose.msra.mxu0 %v748
        %766 = vmatmul.f32.gmra.mxu0 %v746
        %v767 = vpop.f32.mrf.mxu0
        %v768 = vadd.f32 0.0, %v767
        %769 = vdwg.mxu0
        %v770 = vsel %vm223, %v768, -inf
        %771 = vmax.xlane.f32.xlu0 %v770
        %v772 = vpop.xlane.xlu0 %771
        %v773 = vsub.f32 %v768, %v772
        %v774 = vmul.f32 %v773, 1.442695
        %v775 = vpow.pop %v774
        %v776 = vsel %vm223, %v775, 0.0
        %777 = vadd.xlane.f32.xlu0 %v776
        %v778 = vpop.xlane.xlu0 %777
        %v779 = vrcp.pop %v778
        %v780 = vmul.f32 %v778, %v779
        %v781 = vsub.f32 1.0, %v780
        %v782 = vmul.f32 %v779, %v781
        %v783 = vadd.f32 %v779, %v782
        %vm784 = vweird.f32 %v778
        %vm785 = vweird.f32 %v779
        %vm786 = vmor %vm784, %vm785
        %v787 = vsel %vm786, %v779, %v783
        %v788 = vand.u32 2147483647, %v778
        %vm789 = vcmp.eq.f32.partialorder %v788, 8.507059e+37
        %v790 = vand.u32 %v778, 2147483648
        %v791 = vor.u32 1.1754944e-38, %v790
        %v792 = vsel %vm789, %v791, %v787
        %v793 = vmul.f32 %v775, %v792
        %794 = vrot.lane.b32.xlu0 %v193, 36
        %v795 = vpop.permute.xlu0 %794
        %v798 = vsel %vm223, %v793, 0
        %800 = vmatpush.msra.mxu0 0.0
        %801 = vmatpush.msra.mxu0 0.0
        %802 = vmatpush.msra.mxu0 0.0
        %803 = vmatpush.msra.mxu0 0.0
        %804 = vmatpush.msra.mxu0 0.0
        %805 = vmatpush.msra.mxu0 0.0
        %806 = vmatpush.msra.mxu0 0.0
        %807 = vmatpush.msra.mxu0 0.0
        %808 = vmatpush.msra.mxu0 0.0
        %809 = vmatpush.msra.mxu0 0.0
        %810 = vmatpush.msra.mxu0 0.0
        %811 = vmatpush.msra.mxu0 0.0
        %812 = vmatpush.msra.mxu0 0.0
        %813 = vmatpush.msra.mxu0 0.0
        %814 = vmatpush.msra.mxu0 0.0
        %815 = vmatpush.msra.mxu0 %v795
        %816 = vmatmul.f32.gmra.mxu0 %v798
        %v817 = vpop.f32.mrf.mxu0
        %v818 = vadd.f32 0.0, %v817
        %819 = vdwg.mxu0
        %821 = vrot.lane.b32.xlu0 %v350, 4
        %v822 = vpop.permute.xlu0 %821
        %825 = vrot.lane.b32.xlu0 %v428, 8
        %v826 = vpop.permute.xlu0 %825
        %829 = vrot.lane.b32.xlu0 %v506, 12
        %v830 = vpop.permute.xlu0 %829
        %833 = vrot.lane.b32.xlu0 %v584, 16
        %v834 = vpop.permute.xlu0 %833
        %837 = vrot.lane.b32.xlu0 %v662, 20
        %v838 = vpop.permute.xlu0 %837
        %841 = vrot.lane.b32.xlu0 %v740, 24
        %v842 = vpop.permute.xlu0 %841
        %845 = vrot.lane.b32.xlu0 %v818, 28
        %v846 = vpop.permute.xlu0 %845
        %v848 = vsel %vm198, %v272, %v822
        %v849 = vsel %vm223, %v848, %v826
        %vm850 = vcmask 97280
        %v851 = vsel %vm850, %v849, %v830
        %vm852 = vcmask 130048
        %v853 = vsel %vm852, %v851, %v834
        %vm854 = vcmask 162816
        %v855 = vsel %vm854, %v853, %v838
        %vm856 = vcmask 195584
        %v857 = vsel %vm856, %v855, %v842
        %vm858 = vcmask 228352
        %v859 = vsel %vm858, %v857, %v846
        %v860 = vld [vmem:[%s2] sm:$0xff]
        %v861 = vld [vmem:[%s2 + $0x8] sm:$0xff]
        %v862 = vld [vmem:[%s2 + $0x10] sm:$0xff]
        %v863 = vld [vmem:[%s2 + $0x18] sm:$0xff]
        %v864 = vld [vmem:[%s2 + $0x20] sm:$0x1]
        %v865 = vperm.slane %v864, 0
        %v867 = vsel %vm171, %v859, 0
        %869 = vmatpush.msra.mxu0 0.0
        %870 = vmatpush.msra.mxu0 0.0
        %871 = vmatpush.msra.mxu0 0.0
        %872 = vmatpush.msra.mxu0 0.0
        %873 = vmatpush.msra.mxu0 0.0
        %874 = vmatpush.msra.mxu0 0.0
        %875 = vmatpush.msra.mxu0 0.0
        %876 = vmatpush.msra.mxu0 0.0
        %877 = vmatpush.msra.mxu0 0.0
        %878 = vmatpush.msra.mxu0 0.0
        %879 = vmatpush.msra.mxu0 0.0
        %880 = vmatpush.msra.mxu0 0.0
        %881 = vmatpush.msra.mxu0 %v863
        %882 = vmatpush.msra.mxu0 %v862
        %883 = vmatpush.msra.mxu0 %v861
        %884 = vmatpush.msra.mxu0 %v860
        %885 = vmatmul.f32.gmra.mxu0 %v867
        %v886 = vpop.f32.mrf.mxu0
        %v887 = vadd.f32 %v865, %v886
        %888 = vdwg.mxu0
        %889 = vst.msk [vmem:[%s161] sm:$0xff] %vm171, %v887
        %s890 = sand.u32 %s93, 1
        %s891 = scalar_lea.sflag [#allocation3], %s890
        %s892 = sand.u32 %s93, 1
        %s893 = smul.addr %s892, 8
        %s894 = scalar_lea.vmem [#allocation2], %s893
        // Predicated region
        $region33: #{tpu_custom_call.1} parent=31 // pred_check
          %p895 = pneg %p103
        $region34: #{tpu_custom_call.1} parent=31 // pred_check_branch
          %897 = sbr.rel (%p895) target = $region36
        $region35: #{tpu_custom_call.1} parent=31 // pred_region
          %899 = vsyncadd %s891, 0
          %s900 = smul.addr %s17, 8
          %s901 = scalar_lea.hbm %s3, %s900
          %s903 = sshll.u32 %s894, 4
          %s904 = int_to_ptr.vmem [resolvable:$true] %s903
          %s905 = sshll.u32 %s901, 4
          %s906 = int_to_ptr.hbm [resolvable:$true] %s905
          %908 = dma.vmem_to_hbm [thread:$0]  %s904, 128, %s906, %s891
        $region36: #{tpu_custom_call.1} parent=31 // pred_fallthru
          _
      $region32: #{tpu_custom_call.1} parent=5 // pred_fallthru
        _
      %p909 = scmp.le.s32.totalorder 2, %s12
      // Predicated region
      $region37: #{tpu_custom_call.1} parent=5 // pred_check
        %p910 = pneg %p909
      $region38: #{tpu_custom_call.1} parent=5 // pred_check_branch
        %912 = sbr.rel (%p910) target = $region40
      $region39: #{tpu_custom_call.1} parent=5 // pred_region
        %s913 = ssub.s32 %s12, 2
        // Predicated region
        $region41: #{tpu_custom_call.1} parent=39 // pred_check
          %p914 = pneg %p109
        $region42: #{tpu_custom_call.1} parent=39 // pred_check_branch
          %916 = sbr.rel (%p914) target = $region44
        $region43: #{tpu_custom_call.1} parent=39 // pred_region
          %s917 = sand.u32 %s94, 1
          %s918 = scalar_lea.sflag [#allocation3], %s917
          %s919 = sand.u32 %s94, 1
          %s920 = smul.addr %s919, 8
          %s921 = scalar_lea.vmem [#allocation2], %s920
          %923 = dma.done %s918, 128
        $region44: #{tpu_custom_call.1} parent=39 // pred_fallthru
          _
      $region40: #{tpu_custom_call.1} parent=5 // pred_fallthru
        _
    $region6: #{tpu_custom_call.1} parent=1 // loop_footer
      %s16 = sadd.s32 1, %s12
    $region7: #{tpu_custom_call.1} parent=1 // loop_footer_branch
      %11 = sbr.rel target = $region3
    $region8: #{tpu_custom_call.1} parent=1 // loop_exit
      _
    %924 = vsyncpa [#allocation3], 1
    %s925 = scalar_lea.sflag [#allocation3], 1
    %926 = vsyncpa %s925, 1

</llo_original>
